<compile_context>
chip_gen: v6e
topology: v6e:2x2x1
jax: 0.10.0
libtpu: 0.0.40
codegen_flags: <defaults>
</compile_context>

<pallas_src>
import functools
import math

import jax
import jax.numpy as jnp
from jax.experimental import pallas as pl
from jax.experimental.pallas import tpu as pltpu


_VMEM_LIMIT_BYTES = 32 * 1024 * 1024  # explicit; < physical VMEM on v5e/v6e/v7x
_TILE_BUDGET_BYTES = 6 * 1024 * 1024  # per output buffer (double-buffered by Pallas)


# ---------------------------------------------------------------------------
# Kernels
# ---------------------------------------------------------------------------

def _folded_kernel(x_ref, scale_ref, sub_ref, phase_ref, out_ref, *, k: int,
                   fused: bool):
    """Lane-dense variant: k batch rows folded into the lane axis.

    x_ref:     (rows, k)  f32 -- k timesteps per folded output row
    scale_ref: (1, K)     f32 -- [freqs | freqs] pattern tiled k times (K = k*dim)
    sub_ref:   (1, K)     i32 -- lane -> which of the k folded rows it belongs to
    phase_ref: (1, K)     f32 -- 0.0 on sin lanes, pi/2 on cos lanes
    out_ref:   (rows, K)  f32 -- K is a multiple of 128 -> unmasked dense stores
    """
    rows, K = out_ref.shape
    x = x_ref[...]                                   # (rows, k)
    sub = sub_ref[...]                               # (1, K)
    # Splat each folded row's timestep across its `dim` lanes with a short
    # lane-broadcast + select chain (VPU); MXU/XLU stay idle and the ~3*k ops
    # per vreg hide under the sin/cos polynomials.
    xb = jnp.broadcast_to(x[:, 0:1], (rows, K))
    for j in range(1, k):
        xb = jnp.where(sub == j, x[:, j:j + 1], xb)
    ang = xb * scale_ref[...]                        # (rows, K)
    if fused:
        # One trig call for the whole block: cos(t) == sin(t + pi/2).
        # Sin lanes add exactly 0.0 (bit-exact); cos lanes deviate by
        # <= ~0.5 ulp(angle) (~4e-5 abs for timesteps up to ~1e3).
        out_ref[...] = jnp.sin(ang + phase_ref[...])
    else:
        # Exact: same f32 products and same trig arguments as the reference.
        out_ref[...] = jnp.where(phase_ref[...] == 0.0,
                                 jnp.sin(ang), jnp.cos(ang))


def _split_kernel(x_ref, freqs_ref, out_ref, *, half_dim: int):
    """Fallback (no folding): two half-row slice stores, one trig per element.
    The product is recomputed per store so Mosaic can fuse mul->sin->store
    per vreg instead of materializing a block-sized shared temp."""
    out_ref[:, :half_dim] = jnp.sin(x_ref[...] * freqs_ref[...])
    out_ref[:, half_dim:] = jnp.cos(x_ref[...] * freqs_ref[...])


# ---------------------------------------------------------------------------
# Wrapper
# ---------------------------------------------------------------------------

def _fold_factor(b: int, dim: int) -> int:
    """How many batch rows to fold into the lane axis (1 = no folding)."""
    k = 128 // math.gcd(dim, 128)          # smallest k with (k*dim) % 128 == 0
    if k > 1 and k <= 16 and b % k == 0:
        return k
    return 1                               # fall back to the split-store path


def _pick_rows(total_rows: int, row_bytes: int) -> int:
    """Rows per output block: big enough to amortize the ~0.35us/step overhead
    (target ~6 MiB per buffer, well under the explicit 32 MiB VMEM limit even
    with double buffering), but >=2 blocks when there is enough work so v7x's
    two TensorCores both get a share of the 'parallel' batch axis."""
    t = max(8, (_TILE_BUDGET_BYTES // max(row_bytes, 1)) // 8 * 8)
    if total_rows >= 16:
        t = min(t, max(8, (total_rows // 2) // 8 * 8))
    return min(t, total_rows)


def sinusoidal_pos_emb(x: jax.Array, dim: int, max_period: int = 1000, *,
                       fuse_sincos: bool = False) -> jax.Array:
    """Pallas TPU implementation of SinusoidalPosEmb.forward.

    Args:
      x:   (B,) timesteps (any float/int dtype).
      dim: embedding dimension (even, >= 4).
      fuse_sincos: if True, use one sin() call via cos(t)=sin(t+pi/2)
        (~2x less VALU work, tiny numerical deviation on the cos half).
    Returns:
      (B, dim) float32: [sin | cos].
    """
    assert x.ndim == 1, "x must be a 1-D tensor of timesteps"
    assert dim % 2 == 0, "dim must be even"
    half_dim = dim // 2
    assert half_dim > 1, "dim must be >= 4 (reference divides by half_dim - 1)"

    b = x.shape[0]
    x32 = x.astype(jnp.float32)

    # Frequency table hoisted out of the kernel (tiny resident constant).
    scale = math.log(max_period) / (half_dim - 1)
    freqs = jnp.exp(jnp.arange(half_dim, dtype=jnp.float32) * (-scale))

    params = pltpu.CompilerParams(
        dimension_semantics=("parallel",),          # batch axis -> megacore split
        vmem_limit_bytes=_VMEM_LIMIT_BYTES,
    )

    k = _fold_factor(b, dim)
    if k > 1:
        # Lane-dense path: output viewed as (b//k, k*dim), k*dim % 128 == 0.
        groups, big_dim = b // k, k * dim
        tile_g = _pick_rows(groups, big_dim * 4)
        lane = jnp.arange(big_dim, dtype=jnp.int32)
        scale_c = jnp.tile(jnp.concatenate([freqs, freqs]), k).reshape(1, big_dim)
        sub_c = (lane // dim).reshape(1, big_dim)
        phase_c = jnp.where((lane % dim) < half_dim,
                            jnp.float32(0.0),
                            jnp.float32(math.pi / 2)).reshape(1, big_dim)

        out = pl.pallas_call(
            functools.partial(_folded_kernel, k=k, fused=fuse_sincos),
            out_shape=jax.ShapeDtypeStruct((groups, big_dim), jnp.float32),
            grid=(pl.cdiv(groups, tile_g),),        # ragged last block is masked
            in_specs=[
                pl.BlockSpec((tile_g, k), lambda i: (i, 0)),
                pl.BlockSpec((1, big_dim), lambda i: (0, 0)),
                pl.BlockSpec((1, big_dim), lambda i: (0, 0)),
                pl.BlockSpec((1, big_dim), lambda i: (0, 0)),
            ],
            out_specs=pl.BlockSpec((tile_g, big_dim), lambda i: (i, 0)),
            compiler_params=params,
        )(x32.reshape(groups, k), scale_c, sub_c, phase_c)
        # Contiguous row-major (groups, k*dim) -> (b, dim): free view, no HBM pass.
        return out.reshape(b, dim)

    # Fallback path: no folding (dim already lane-aligned, or b % k != 0).
    tile_b = _pick_rows(b, dim * 4)
    return pl.pallas_call(
        functools.partial(_split_kernel, half_dim=half_dim),
        out_shape=jax.ShapeDtypeStruct((b, dim), jnp.float32),
        grid=(pl.cdiv(b, tile_b),),                 # ragged last block is masked
        in_specs=[
            pl.BlockSpec((tile_b, 1), lambda i: (i, 0)),
            pl.BlockSpec((1, half_dim), lambda i: (0, 0)),
        ],
        out_specs=pl.BlockSpec((tile_b, dim), lambda i: (i, 0)),
        compiler_params=params,
    )(x32.reshape(b, 1), freqs.reshape(1, half_dim))


# ---------------------------------------------------------------------------
# Reference + self-test
# ---------------------------------------------------------------------------

def _reference(x, dim, max_period=1000):
    half_dim = dim // 2
    emb = math.log(max_period) / (half_dim - 1)
    emb = jnp.exp(jnp.arange(half_dim, dtype=jnp.float32) * -emb)
    emb = x.astype(jnp.float32)[:, None] * emb[None, :]
    return jnp.concatenate([jnp.sin(emb), jnp.cos(emb)], axis=-1)


if __name__ == "__main__":
    DIM = 32

    # 1) Folded lane-dense path (dim=32 -> 4 rows per 128-lane group).
    x1 = jax.random.uniform(jax.random.PRNGKey(0), (8,), dtype=jnp.float32) * 1000.0
    out1 = jax.block_until_ready(sinusoidal_pos_emb(x1, DIM))
    assert out1.shape == (8, DIM)
    assert jnp.allclose(out1, _reference(x1, DIM), atol=1e-4, rtol=1e-4)

    # 2) Ragged batch (13 % 4 != 0) -> split-kernel fallback; no pad, no slice.
    x2 = jax.random.uniform(jax.random.PRNGKey(1), (13,), dtype=jnp.float32) * 1000.0
    out2 = jax.block_until_ready(sinusoidal_pos_emb(x2, DIM))
    assert out2.shape == (13, DIM)
    assert jnp.allclose(out2, _reference(x2, DIM), atol=1e-4, rtol=1e-4)

    # 3) Larger batch -> multi-block grid (pipelined, 'parallel' batch axis),
    #    plus the optional fused single-trig variant.
    x3 = jax.random.uniform(jax.random.PRNGKey(2), (256,), dtype=jnp.float32) * 1000.0
    out3 = jax.block_until_ready(sinusoidal_pos_emb(x3, DIM))
    assert jnp.allclose(out3, _reference(x3, DIM), atol=1e-4, rtol=1e-4)
    out3f = jax.block_until_ready(sinusoidal_pos_emb(x3, DIM, fuse_sincos=True))
    assert jnp.allclose(out3f, _reference(x3, DIM), atol=5e-4, rtol=1e-4)

    print("KERNEL_OK")
</pallas_src>

<mosaic_0001>
module attributes {stable_mosaic.version = 11 : i64} {
  func.func @_folded_kernel(%arg0: i32, %arg1: memref<2x4xf32, #tpu.memory_space<vmem>>, %arg2: memref<1x128xf32, #tpu.memory_space<vmem>>, %arg3: memref<1x128xi32, #tpu.memory_space<vmem>>, %arg4: memref<1x128xf32, #tpu.memory_space<vmem>>, %arg5: memref<2x128xf32, #tpu.memory_space<vmem>>) attributes {dimension_semantics = [#tpu.dimension_semantics<parallel>], iteration_bounds = array<i64: 1>, scalar_prefetch = 0 : i64, scratch_operands = 0 : i64, tpu.core_type = #tpu.core_type<tc>, window_params = [{transform_indices = @transform_0, window_bounds = array<i64: 2, 4>}, {pipeline_mode = #tpu.pipeline_mode<synchronous>, transform_indices = @transform_1, window_bounds = array<i64: 1, 128>}, {pipeline_mode = #tpu.pipeline_mode<synchronous>, transform_indices = @transform_2, window_bounds = array<i64: 1, 128>}, {pipeline_mode = #tpu.pipeline_mode<synchronous>, transform_indices = @transform_3, window_bounds = array<i64: 1, 128>}, {transform_indices = @transform_4, window_bounds = array<i64: 2, 128>}]} {
    %c0 = arith.constant 0 : index
    %c0_0 = arith.constant 0 : index
    %0 = vector.load %arg1[%c0, %c0_0] : memref<2x4xf32, #tpu.memory_space<vmem>>, vector<2x4xf32>
    %c0_1 = arith.constant 0 : index
    %c0_2 = arith.constant 0 : index
    %1 = vector.load %arg3[%c0_1, %c0_2] : memref<1x128xi32, #tpu.memory_space<vmem>>, vector<1x128xi32>
    %2 = vector.extract_strided_slice %0 {offsets = [0, 0], sizes = [2, 1], strides = [1, 1]} : vector<2x4xf32> to vector<2x1xf32>
    %3 = vector.shape_cast %2 : vector<2x1xf32> to vector<2x1xf32>
    %4 = vector.broadcast %3 : vector<2x1xf32> to vector<2x128xf32>
    %c1_i32 = arith.constant 1 : i32
    %5 = vector.broadcast %c1_i32 : i32 to vector<1x128xi32>
    %6 = arith.cmpi eq, %1, %5 : vector<1x128xi32>
    %7 = vector.extract_strided_slice %0 {offsets = [0, 1], sizes = [2, 1], strides = [1, 1]} : vector<2x4xf32> to vector<2x1xf32>
    %8 = vector.shape_cast %6 : vector<1x128xi1> to vector<1x128xi1>
    %9 = vector.broadcast %8 : vector<1x128xi1> to vector<2x128xi1>
    %10 = vector.shape_cast %7 : vector<2x1xf32> to vector<2x1xf32>
    %11 = vector.broadcast %10 : vector<2x1xf32> to vector<2x128xf32>
    %12 = arith.select %9, %11, %4 : vector<2x128xi1>, vector<2x128xf32>
    %c2_i32 = arith.constant 2 : i32
    %13 = vector.broadcast %c2_i32 : i32 to vector<1x128xi32>
    %14 = arith.cmpi eq, %1, %13 : vector<1x128xi32>
    %15 = vector.extract_strided_slice %0 {offsets = [0, 2], sizes = [2, 1], strides = [1, 1]} : vector<2x4xf32> to vector<2x1xf32>
    %16 = vector.shape_cast %14 : vector<1x128xi1> to vector<1x128xi1>
    %17 = vector.broadcast %16 : vector<1x128xi1> to vector<2x128xi1>
    %18 = vector.shape_cast %15 : vector<2x1xf32> to vector<2x1xf32>
    %19 = vector.broadcast %18 : vector<2x1xf32> to vector<2x128xf32>
    %20 = arith.select %17, %19, %12 : vector<2x128xi1>, vector<2x128xf32>
    %c3_i32 = arith.constant 3 : i32
    %21 = vector.broadcast %c3_i32 : i32 to vector<1x128xi32>
    %22 = arith.cmpi eq, %1, %21 : vector<1x128xi32>
    %23 = vector.extract_strided_slice %0 {offsets = [0, 3], sizes = [2, 1], strides = [1, 1]} : vector<2x4xf32> to vector<2x1xf32>
    %24 = vector.shape_cast %22 : vector<1x128xi1> to vector<1x128xi1>
    %25 = vector.broadcast %24 : vector<1x128xi1> to vector<2x128xi1>
    %26 = vector.shape_cast %23 : vector<2x1xf32> to vector<2x1xf32>
    %27 = vector.broadcast %26 : vector<2x1xf32> to vector<2x128xf32>
    %28 = arith.select %25, %27, %20 : vector<2x128xi1>, vector<2x128xf32>
    %c0_3 = arith.constant 0 : index
    %c0_4 = arith.constant 0 : index
    %29 = vector.load %arg2[%c0_3, %c0_4] : memref<1x128xf32, #tpu.memory_space<vmem>>, vector<1x128xf32>
    %30 = vector.broadcast %29 : vector<1x128xf32> to vector<2x128xf32>
    %31 = arith.mulf %28, %30 : vector<2x128xf32>
    %c0_5 = arith.constant 0 : index
    %c0_6 = arith.constant 0 : index
    %32 = vector.load %arg4[%c0_5, %c0_6] : memref<1x128xf32, #tpu.memory_space<vmem>>, vector<1x128xf32>
    %cst = arith.constant 0.000000e+00 : f32
    %33 = vector.broadcast %cst : f32 to vector<1x128xf32>
    %34 = arith.cmpf oeq, %32, %33 : vector<1x128xf32>
    %35 = math.sin %31 : vector<2x128xf32>
    %36 = math.cos %31 : vector<2x128xf32>
    %37 = vector.shape_cast %34 : vector<1x128xi1> to vector<1x128xi1>
    %38 = vector.broadcast %37 : vector<1x128xi1> to vector<2x128xi1>
    %39 = arith.select %38, %35, %36 : vector<2x128xi1>, vector<2x128xf32>
    %c0_7 = arith.constant 0 : index
    %c0_8 = arith.constant 0 : index
    %40 = vector.load %arg5[%c0_7, %c0_8] : memref<2x128xf32, #tpu.memory_space<vmem>>, vector<2x128xf32>
    tpu.vector_store %arg5[%c0_7, %c0_8], %39 {strides = array<i32>} : memref<2x128xf32, #tpu.memory_space<vmem>>, vector<2x128xf32>,
    return
  }
  func.func @transform_0(%arg0: i32) -> (i32, i32) {
    %c0_i32 = arith.constant 0 : i32
    %c0_i32_0 = arith.constant 0 : i32
    return %arg0, %c0_i32 : i32, i32
  }
  func.func @transform_1(%arg0: i32) -> (i32, i32) {
    %c0_i32 = arith.constant 0 : i32
    %c0_i32_0 = arith.constant 0 : i32
    %c0_i32_1 = arith.constant 0 : i32
    return %c0_i32, %c0_i32_0 : i32, i32
  }
  func.func @transform_2(%arg0: i32) -> (i32, i32) {
    %c0_i32 = arith.constant 0 : i32
    %c0_i32_0 = arith.constant 0 : i32
    %c0_i32_1 = arith.constant 0 : i32
    return %c0_i32, %c0_i32_0 : i32, i32
  }
  func.func @transform_3(%arg0: i32) -> (i32, i32) {
    %c0_i32 = arith.constant 0 : i32
    %c0_i32_0 = arith.constant 0 : i32
    %c0_i32_1 = arith.constant 0 : i32
    return %c0_i32, %c0_i32_0 : i32, i32
  }
  func.func @transform_4(%arg0: i32) -> (i32, i32) {
    %c0_i32 = arith.constant 0 : i32
    %c0_i32_0 = arith.constant 0 : i32
    return %arg0, %c0_i32 : i32, i32
  }
}

</mosaic_0001>

<llo_original>
// kernel: tpu_custom_call.1
$region0: #{tpu_custom_call.1}
  #allocation0 [shape = 'u32[]', space=smem, size = 0x4, offset = 0x4, fixed_abs, tag = 'smem constant byte address 0x4 - core index']
  #allocation1 [shape = 'u32[144,128]{1,0:T(1,128)}', space=vmem, size = 0x12000, scoped, tag = 'internal scratch']
  %s0 = inlined_call_operand.hbm [shape: f32[2,4], index: 0, kind: input, shape index: {}]
  %s1 = inlined_call_operand.vmem [shape: f32[1,128], index: 1, kind: input, shape index: {}]
  %s2 = inlined_call_operand.vmem [shape: s32[1,128], index: 2, kind: input, shape index: {}]
  %s3 = inlined_call_operand.vmem [shape: f32[1,128], index: 3, kind: input, shape index: {}]
  %s4 = inlined_call_operand.hbm [shape: f32[2,128], index: 4, kind: output, shape index: {}]
  %s5 = sld [smem:[#allocation0]]
  $region30: #{tpu_custom_call.1} parent=0
    _
  %s7 = ssub.s32 1, %s5
  %s8 = scalar_select 0, %s7, %s5
  $region1: #{tpu_custom_call.1} parent=0
    #allocation2 [shape = 'u8[1024]{0}', space=vmem, size = 0x400, scoped, tag = 'input window, operand 0, single buffered']
    #allocation3 [shape = 's32[1]{0}', space=sflag, size = 0x4, scoped, tag = 'scoped memory for tpu_custom_call.1']
    #allocation4 [shape = 's32[1]{0}', space=sflag, size = 0x4, scoped, tag = 'scoped memory for tpu_custom_call.1']
    #allocation5 [shape = 'u8[1024]{0}', space=vmem, size = 0x400, scoped, tag = 'output window, operand 0, single buffered']
    %9 = vsyncpa [#allocation3], 0
    %10 = vsyncpa [#allocation4], 0
    // Predicated region
    $region2: #{tpu_custom_call.1} parent=1 // pred_check
      _
    $region3: #{tpu_custom_call.1} parent=1 // pred_check_branch
      %12 = sbr.rel (0) target = $region5
    $region4: #{tpu_custom_call.1} parent=1 // pred_region
      %s14 = ssub.s32 32, 32
      %15 = vsyncadd [#allocation3], %s14
      %s17 = sshll.u32 [#allocation2], 4
      %s18 = int_to_ptr.vmem [resolvable:$true] %s17
      %20 = dma.hbm_to_vmem [thread:$0]  %s0, 32, %s18, [#allocation3]
    $region5: #{tpu_custom_call.1} parent=1 // pred_fallthru
      _
    // Predicated region
    $region6: #{tpu_custom_call.1} parent=1 // pred_check
      _
    $region7: #{tpu_custom_call.1} parent=1 // pred_check_branch
      %22 = sbr.rel (0) target = $region9
    $region8: #{tpu_custom_call.1} parent=1 // pred_region
      _
    $region9: #{tpu_custom_call.1} parent=1 // pred_fallthru
      _
    // Predicated region
    $region10: #{tpu_custom_call.1} parent=1 // pred_check
      _
    $region11: #{tpu_custom_call.1} parent=1 // pred_check_branch
      %24 = sbr.rel (0) target = $region13
    $region12: #{tpu_custom_call.1} parent=1 // pred_region
      _
    $region13: #{tpu_custom_call.1} parent=1 // pred_fallthru
      _
    // Predicated region
    $region14: #{tpu_custom_call.1} parent=1 // pred_check
      _
    $region15: #{tpu_custom_call.1} parent=1 // pred_check_branch
      %26 = sbr.rel (0) target = $region17
    $region16: #{tpu_custom_call.1} parent=1 // pred_region
      _
    $region17: #{tpu_custom_call.1} parent=1 // pred_fallthru
      _
    // Predicated region
    $region18: #{tpu_custom_call.1} parent=1 // pred_check
      _
    $region19: #{tpu_custom_call.1} parent=1 // pred_check_branch
      %28 = sbr.rel (0) target = $region21
    $region20: #{tpu_custom_call.1} parent=1 // pred_region
      %29 = dma.done [#allocation3], 32
    $region21: #{tpu_custom_call.1} parent=1 // pred_fallthru
      _
    %v30 = vld [vmem:[#allocation2] sm:$0x3]
    %v31 = vld [vmem:[%s2] sm:$0x1]
    %33 = vset.pattern.permute.xlu0 0
    %34 = vperm.xlu0 %33, %v30
    %v35 = vpop.permute.xlu0 %34
    %vm37 = vcmp.eq.s32.totalorder %v31, 1
    %v38 = vsel %vm37, 1, 0
    %v39 = vlaneseq
    %v40 = vshrl.u32 %v39, 7
    %v41 = vsub.s32 0, %v40
    %v42 = vrot.slane %v38, %v41
    %vm43 = vcmp.eq.s32.totalorder %v42, 1
    %44 = vset.pattern.permute.xlu0 1
    %45 = vperm.xlu0 %44, %v30
    %v46 = vpop.permute.xlu0 %45
    %v48 = vsel %vm43, %v46, %v35
    %vm49 = vcmp.eq.s32.totalorder %v31, 2
    %v50 = vsel %vm49, 1, 0
    %v51 = vlaneseq
    %v52 = vshrl.u32 %v51, 7
    %v53 = vsub.s32 0, %v52
    %v54 = vrot.slane %v50, %v53
    %vm55 = vcmp.eq.s32.totalorder %v54, 1
    %56 = vset.pattern.permute.xlu0 2
    %57 = vperm.xlu0 %56, %v30
    %v58 = vpop.permute.xlu0 %57
    %v60 = vsel %vm55, %v58, %v48
    %vm61 = vcmp.eq.s32.totalorder %v31, 3
    %v62 = vsel %vm61, 1, 0
    %v63 = vlaneseq
    %v64 = vshrl.u32 %v63, 7
    %v65 = vsub.s32 0, %v64
    %v66 = vrot.slane %v62, %v65
    %vm67 = vcmp.eq.s32.totalorder %v66, 1
    %68 = vset.pattern.permute.xlu0 3
    %69 = vperm.xlu0 %68, %v30
    %v70 = vpop.permute.xlu0 %69
    %v72 = vsel %vm67, %v70, %v60
    %v73 = vld [vmem:[%s1] sm:$0x1]
    %v75 = vlaneseq
    %v76 = vshrl.u32 %v75, 7
    %v77 = vsub.s32 0, %v76
    %v78 = vrot.slane %v73, %v77
    %v80 = vmul.f32 %v72, %v78
    %v81 = vld [vmem:[%s3] sm:$0x1]
    %vm82 = vcmp.eq.f32.partialorder %v81, 0.0
    %v83 = vand.u32 2147483647, %v80
    %vm84 = vcmp.le.f32.partialorder %v83, 0.7853982
    %vm85 = vcmp.lt.s32.totalorder %v80, 0
    %v86 = vand.u32 %v80, 2139095040
    %v87 = vshrl.u32 %v86, 23
    %v88 = vsub.s32 %v87, 127
    %v89 = vand.u32 2147483647, %v80
    %v90 = vand.u32 %v89, 8388607
    %v91 = vor.u32 %v90, 8388608
    %v92 = vsub.s32 0, %v91
    %v93 = vadd.s32 %v88, 1
    %vm94 = vcmp.gt.s32.totalorder %v93, 0
    %v95 = vsel %vm94, %v93, 0
    %v96 = vshrl.u32 %v95, 5
    %v97 = vand.u32 %v95, 31
    %v98 = vsub.s32 32, %v97
    %v99 = vshrl.u32 683565275, %v98
    %v100 = vshll.u32 683565275, %v97
    %v101 = vshrl.u32 2475754826, %v98
    %v102 = vor.u32 %v100, %v101
    %v103 = vshll.u32 2475754826, %v97
    %v104 = vshrl.u32 2131351028, %v98
    %v105 = vor.u32 %v103, %v104
    %v106 = vshll.u32 2131351028, %v97
    %v107 = vshrl.u32 2102212464, %v98
    %v108 = vor.u32 %v106, %v107
    %v109 = vshll.u32 2102212464, %v97
    %v110 = vshrl.u32 920167782, %v98
    %v111 = vor.u32 %v109, %v110
    %v112 = vshll.u32 920167782, %v97
    %v113 = vshrl.u32 1326507024, %v98
    %v114 = vor.u32 %v112, %v113
    %vm115 = vcmp.lt.s32.totalorder %v96, 1
    %vm116 = vcmp.lt.s32.totalorder %v96, 2
    %vm117 = vcmp.lt.s32.totalorder %v96, 3
    %vm118 = vcmp.lt.s32.totalorder %v96, 4
    %v119 = vsel %vm115, %v99, %v102
    %v120 = vsel %vm118, %v108, 2102212464
    %v121 = vsel %vm117, %v105, %v120
    %v122 = vsel %vm116, %v119, %v121
    %v123 = vsel %vm115, %v102, %v105
    %v124 = vsel %vm118, %v111, 920167782
    %v125 = vsel %vm117, %v108, %v124
    %v126 = vsel %vm116, %v123, %v125
    %v127 = vsel %vm115, %v105, %v108
    %v128 = vsel %vm118, %v114, 1326507024
    %v129 = vsel %vm117, %v111, %v128
    %v130 = vsel %vm116, %v127, %v129
    %v131 = vshll.u32 %v91, 8
    %v132 = vmul.u32.u64.compose %v131, %v130
    %v133 = vextract.low.u32 %v132
    %v134 = vextract.high.u32 %v132
    %v135 = vmul.u32.u64.compose %v131, %v126
    %v136 = vextract.low.u32 %v135
    %v137 = vextract.high.u32 %v135
    %v138 = vmul.u32 %v131, %v122
    %v139 = vadd.s32 %v134, %v136
    %vm140 = vc.u32 %v134, %v136
    %v141 = vadd.s32 %v137, 1
    %v142 = vsel %vm140, %v141, %v137
    %v143 = vadd.s32 %v138, %v142
    %v144 = vadd.s32 %v143, 536870912
    %v145 = vshrl.u32 %v144, 30
    %v146 = vshll.u32 %v145, 30
    %v147 = vsub.s32 %v143, %v146
    %vm148 = vcmp.lt.s32.totalorder %v147, 0
    %v149 = vsub.s32 0, %v147
    %v150 = vsel %vm148, %v149, %v147
    %v151 = vclz %v150
    %v152 = vsub.s32 %v151, 2
    %vm153 = vcmp.gt.s32.totalorder 0, %v152
    %v154 = vsel %vm153, 0, %v152
    %v155 = vsub.s32 32, %v154
    %v156 = vshll.u32 %v147, %v154
    %v157 = vshrl.u32 %v139, %v155
    %v158 = vor.u32 %v156, %v157
    %v159 = vsub.s32 4294967266, %v154
    %v160 = vadd.s32 %v159, 127
    %v161 = vshll.u32 %v160, 23
    %v162 = vor.u32 4788187, %v161
    %v163 = vand.u32 2147483647, %v162
    %v165 = vcvt.s32.f32 %v158
    %v166 = vmul.f32 %v165, %v163
    %v167 = vxor.u32 %v166, 2147483648
    %v168 = vsel %vm85, %v167, %v166
    %v169 = vsub.s32 4, %v145
    %v170 = vsel %vm85, %v169, %v145
    %v171 = vsel %vm84, %v80, %v168
    %v172 = vsel %vm84, 0, %v170
    %v173 = vcosq.f32.pop %v171
    %v174 = vsinq.f32.pop %v171
    %vm175 = vweird.f32 %v80
    %v176 = vadd.s32 %v172, 3
    %v177 = vand.u32 %v176, 3
    %vm178 = vcmp.lt.s32.totalorder %v177, 2
    %vm179 = vcmp.eq.s32.totalorder %v177, 0
    %v180 = vxor.u32 %v174, 2147483648
    %v181 = vsel %vm179, %v173, %v180
    %vm182 = vcmp.eq.s32.totalorder %v177, 2
    %v183 = vxor.u32 %v173, 2147483648
    %v184 = vsel %vm182, %v183, %v174
    %v185 = vsel %vm178, %v181, %v184
    %v186 = vsel %vm175, nan, %v185
    %v187 = vand.u32 2147483647, %v80
    %vm188 = vcmp.le.f32.partialorder %v187, 0.7853982
    %vm189 = vcmp.lt.s32.totalorder %v80, 0
    %v190 = vand.u32 %v80, 2139095040
    %v191 = vshrl.u32 %v190, 23
    %v192 = vsub.s32 %v191, 127
    %v193 = vand.u32 2147483647, %v80
    %v194 = vand.u32 %v193, 8388607
    %v195 = vor.u32 %v194, 8388608
    %v196 = vsub.s32 0, %v195
    %v197 = vadd.s32 %v192, 1
    %vm198 = vcmp.gt.s32.totalorder %v197, 0
    %v199 = vsel %vm198, %v197, 0
    %v200 = vshrl.u32 %v199, 5
    %v201 = vand.u32 %v199, 31
    %v202 = vsub.s32 32, %v201
    %v203 = vshrl.u32 683565275, %v202
    %v204 = vshll.u32 683565275, %v201
    %v205 = vshrl.u32 2475754826, %v202
    %v206 = vor.u32 %v204, %v205
    %v207 = vshll.u32 2475754826, %v201
    %v208 = vshrl.u32 2131351028, %v202
    %v209 = vor.u32 %v207, %v208
    %v210 = vshll.u32 2131351028, %v201
    %v211 = vshrl.u32 2102212464, %v202
    %v212 = vor.u32 %v210, %v211
    %v213 = vshll.u32 2102212464, %v201
    %v214 = vshrl.u32 920167782, %v202
    %v215 = vor.u32 %v213, %v214
    %v216 = vshll.u32 920167782, %v201
    %v217 = vshrl.u32 1326507024, %v202
    %v218 = vor.u32 %v216, %v217
    %vm219 = vcmp.lt.s32.totalorder %v200, 1
    %vm220 = vcmp.lt.s32.totalorder %v200, 2
    %vm221 = vcmp.lt.s32.totalorder %v200, 3
    %vm222 = vcmp.lt.s32.totalorder %v200, 4
    %v223 = vsel %vm219, %v203, %v206
    %v224 = vsel %vm222, %v212, 2102212464
    %v225 = vsel %vm221, %v209, %v224
    %v226 = vsel %vm220, %v223, %v225
    %v227 = vsel %vm219, %v206, %v209
    %v228 = vsel %vm222, %v215, 920167782
    %v229 = vsel %vm221, %v212, %v228
    %v230 = vsel %vm220, %v227, %v229
    %v231 = vsel %vm219, %v209, %v212
    %v232 = vsel %vm222, %v218, 1326507024
    %v233 = vsel %vm221, %v215, %v232
    %v234 = vsel %vm220, %v231, %v233
    %v235 = vshll.u32 %v195, 8
    %v236 = vmul.u32.u64.compose %v235, %v234
    %v237 = vextract.low.u32 %v236
    %v238 = vextract.high.u32 %v236
    %v239 = vmul.u32.u64.compose %v235, %v230
    %v240 = vextract.low.u32 %v239
    %v241 = vextract.high.u32 %v239
    %v242 = vmul.u32 %v235, %v226
    %v243 = vadd.s32 %v238, %v240
    %vm244 = vc.u32 %v238, %v240
    %v245 = vadd.s32 %v241, 1
    %v246 = vsel %vm244, %v245, %v241
    %v247 = vadd.s32 %v242, %v246
    %v248 = vadd.s32 %v247, 536870912
    %v249 = vshrl.u32 %v248, 30
    %v250 = vshll.u32 %v249, 30
    %v251 = vsub.s32 %v247, %v250
    %vm252 = vcmp.lt.s32.totalorder %v251, 0
    %v253 = vsub.s32 0, %v251
    %v254 = vsel %vm252, %v253, %v251
    %v255 = vclz %v254
    %v256 = vsub.s32 %v255, 2
    %vm257 = vcmp.gt.s32.totalorder 0, %v256
    %v258 = vsel %vm257, 0, %v256
    %v259 = vsub.s32 32, %v258
    %v260 = vshll.u32 %v251, %v258
    %v261 = vshrl.u32 %v243, %v259
    %v262 = vor.u32 %v260, %v261
    %v263 = vsub.s32 4294967266, %v258
    %v264 = vadd.s32 %v263, 127
    %v265 = vshll.u32 %v264, 23
    %v266 = vor.u32 4788187, %v265
    %v267 = vand.u32 2147483647, %v266
    %v269 = vcvt.s32.f32 %v262
    %v270 = vmul.f32 %v269, %v267
    %v271 = vxor.u32 %v270, 2147483648
    %v272 = vsel %vm189, %v271, %v270
    %v273 = vsub.s32 4, %v249
    %v274 = vsel %vm189, %v273, %v249
    %v275 = vsel %vm188, %v80, %v272
    %v276 = vsel %vm188, 0, %v274
    %v277 = vcosq.f32.pop %v275
    %v278 = vsinq.f32.pop %v275
    %vm279 = vweird.f32 %v80
    %v280 = vand.u32 %v276, 3
    %vm281 = vcmp.lt.s32.totalorder %v280, 2
    %vm282 = vcmp.eq.s32.totalorder %v280, 0
    %v283 = vxor.u32 %v278, 2147483648
    %v284 = vsel %vm282, %v277, %v283
    %vm285 = vcmp.eq.s32.totalorder %v280, 2
    %v286 = vxor.u32 %v277, 2147483648
    %v287 = vsel %vm285, %v286, %v278
    %v288 = vsel %vm281, %v284, %v287
    %v289 = vsel %vm279, nan, %v288
    %v290 = vsel %vm82, 1, 0
    %v291 = vlaneseq
    %v292 = vshrl.u32 %v291, 7
    %v293 = vsub.s32 0, %v292
    %v294 = vrot.slane %v290, %v293
    %vm295 = vcmp.eq.s32.totalorder %v294, 1
    %v296 = vsel %vm295, %v186, %v289
    %297 = vst [vmem:[#allocation5] sm:$0x3] %v296
    // Predicated region
    $region22: #{tpu_custom_call.1} parent=1 // pred_check
      _
    $region23: #{tpu_custom_call.1} parent=1 // pred_check_branch
      %299 = sbr.rel (0) target = $region25
    $region24: #{tpu_custom_call.1} parent=1 // pred_region
      %s301 = ssub.s32 32, 32
      %302 = vsyncadd [#allocation4], %s301
      %s304 = sshll.u32 [#allocation5], 4
      %s305 = int_to_ptr.vmem [resolvable:$true] %s304
      %307 = dma.vmem_to_hbm [thread:$0]  %s305, 32, %s4, [#allocation4]
    $region25: #{tpu_custom_call.1} parent=1 // pred_fallthru
      _
    // Predicated region
    $region26: #{tpu_custom_call.1} parent=1 // pred_check
      _
    $region27: #{tpu_custom_call.1} parent=1 // pred_check_branch
      %309 = sbr.rel (0) target = $region29
    $region28: #{tpu_custom_call.1} parent=1 // pred_region
      %310 = dma.done [#allocation4], 32
    $region29: #{tpu_custom_call.1} parent=1 // pred_fallthru
      _
    %311 = vsyncpa [#allocation3], 1
    %312 = vsyncpa [#allocation4], 1

</llo_original>
